<compile_context>
chip_gen: v5e
topology: v5e:2x2
jax: 0.10.0
libtpu: 0.0.40
codegen_flags: <defaults>
</compile_context>

<pallas_src>
import functools

import jax
import jax.numpy as jnp
from jax import lax
from jax.experimental import pallas as pl
from jax.experimental.pallas import tpu as pltpu

_TILE_N_CAP = 2048          # max rows per tile (sublane axis)
_TILE_C_CAP = 2048          # max classes per tile (lane axis)
_MAX_BLOCK_ELEMS = 512 * 1024
_MIN_ROWS_FOR_SPLIT = 128   # split rows into >=2 tiles above this (v7x megacore)


def _round_up(x, m):
    return ((x + m - 1) // m) * m


def _cdiv(a, b):
    return -(-a // b)


def _vmem_budget_and_limit():
    """Per-generation VMEM sizing: budget for the tile chooser, limit for Mosaic."""
    try:
        phys = pltpu.get_tpu_info().vmem_capacity_bytes
    except Exception:
        phys = 64 * 1024 * 1024        # v7x-safe fallback
    limit = min(phys // 2, 64 * 1024 * 1024)     # v5e/v6e: 64 MiB, v7x: 32 MiB
    return limit // 2, limit                      # 2x headroom over the estimate


def _choose_tile_c(c, tile_c=None):
    if tile_c is None:
        tile_c = c if c <= _TILE_C_CAP else _TILE_C_CAP
    if tile_c >= c:
        return c                                   # single full-width class block
    tile_c = max(128, (tile_c // 128) * 128)       # lane dim must be 128-multiple
    # Balance class tiles so the ragged last tile isn't nearly empty.
    g = _cdiv(c, tile_c)
    return max(128, _round_up(_cdiv(c, g), 128))


def _choose_tile_n(n, tile_c, itemsize, budget, tile_n=None):
    if tile_n is None:
        c_lane = _round_up(max(tile_c, 128), 128)
        # per-row VMEM estimate: double-buffered x block + lane-padded targets
        # block + ~6 live f32 (tile_n, c_lane) temporaries + (tile_n, 1) scratch.
        per_row = 2 * c_lane * itemsize + 2 * 128 * 4 + 6 * c_lane * 4 + 4 * 128 * 4
        cap = budget // per_row
        cap = min(cap, _TILE_N_CAP, max(8, _MAX_BLOCK_ELEMS // c_lane))
        cap = max(8, (cap // 8) * 8)
        # Balance tiles so the masked ragged tail stays small; ensure at least two
        # row tiles for moderately large N so the "parallel" axis can be sharded
        # across both TensorCores on v7x.
        g = _cdiv(n, cap)
        if n >= _MIN_ROWS_FOR_SPLIT:
            g = max(g, 2)
        tile_n = _round_up(_cdiv(n, g), 8)
    return max(8, _round_up(tile_n, 8))


def _nca_kernel(x_ref, t_ref, o_ref, m_ref, l_ref, tv_ref, *,
                scale, n_rows, tile_c, num_classes, mask_classes):
    """Online-LSE NCA loss over (row-tile, class-tile) grid; classes are the
    (inner, 'arbitrary') reduction axis, rows are 'parallel'."""
    i = pl.program_id(0)
    kc = pl.program_id(1)
    tile_n = x_ref.shape[0]

    @pl.when(kc == 0)
    def _():
        m_ref[...] = jnp.full(m_ref.shape, -jnp.inf, dtype=jnp.float32)
        l_ref[...] = jnp.zeros(l_ref.shape, dtype=jnp.float32)
        tv_ref[...] = jnp.zeros(tv_ref.shape, dtype=jnp.float32)

    z = x_ref[...].astype(jnp.float32)             # (tile_n, tile_c)
    if scale != 1.0:
        z = z * scale

    # Global class indices of this tile's columns.
    cls = kc * tile_c + lax.broadcasted_iota(jnp.int32, z.shape, 1)
    if mask_classes:
        # Last class tile may read past C: neutralize those lanes.
        z = jnp.where(cls < num_classes, z, -jnp.inf)

    tgt = t_ref[...]                               # (tile_n, 1) int32
    is_pos = cls == tgt
    # Exactly one (class-tile, column) matches per row -> masked-sum capture.
    tv_ref[...] += jnp.sum(jnp.where(is_pos, z, 0.0), axis=1, keepdims=True)

    # Online max / sum-of-exp over class tiles.
    m_prev = m_ref[...]
    m_new = jnp.maximum(m_prev, jnp.max(z, axis=1, keepdims=True))
    l_ref[...] = (l_ref[...] * jnp.exp(m_prev - m_new)
                  + jnp.sum(jnp.exp(z - m_new), axis=1, keepdims=True))
    m_ref[...] = m_new

    @pl.when(kc == pl.num_programs(1) - 1)
    def _():
        num = tv_ref[...] - m_ref[...]                      # s_t - max
        # denominator: full sum of exp, with the positive term replaced by exp(0)=1
        denom = l_ref[...] - jnp.exp(num) + 1.0
        losses = jnp.log(denom) - num                       # (tile_n, 1)
        # Mask rows beyond N (ragged last row tile reads unspecified data).
        row = i * tile_n + lax.broadcasted_iota(jnp.int32, losses.shape, 0)
        losses = jnp.where(row < n_rows, losses, 0.0)
        psum = jnp.sum(losses, axis=0, keepdims=True)       # (1, 1)
        o_ref[0] = jnp.broadcast_to(psum, (8, 128))         # lane-dense partial sum


def unbiased_nca_loss(inputs, targets, scale=1.0, margin=0.0,
                      tile_n=None, tile_c=None):
    """JAX/Pallas equivalent of UnbiasedNCA(scale, margin).forward(inputs, targets)."""
    # TODO(synk): the margin > 0 branch of nca() (additive margin on 4-D inputs) and
    # the exclude_pos_denominator=False fallback to UnbiasedCrossEntropy are not
    # reachable with the module defaults and are not implemented here.
    assert margin == 0.0, "only the default margin=0.0 path is implemented"
    n, c = inputs.shape

    budget, vmem_limit = _vmem_budget_and_limit()
    tile_c = _choose_tile_c(c, tile_c)
    tile_n = _choose_tile_n(n, tile_c, inputs.dtype.itemsize, budget, tile_n)
    g_rows = _cdiv(n, tile_n)
    g_cls = _cdiv(c, tile_c)

    t2 = targets.astype(jnp.int32).reshape(n, 1)

    kernel = functools.partial(
        _nca_kernel,
        scale=float(scale),
        n_rows=n,
        tile_c=tile_c,
        num_classes=c,
        mask_classes=(g_cls * tile_c != c),
    )

    partial_sums = pl.pallas_call(
        kernel,
        out_shape=jax.ShapeDtypeStruct((g_rows, 8, 128), jnp.float32),
        grid_spec=pltpu.PrefetchScalarGridSpec(
            num_scalar_prefetch=0,
            grid=(g_rows, g_cls),                       # class (reduction) axis last
            in_specs=[
                pl.BlockSpec((tile_n, tile_c), lambda i, k: (i, k)),   # similarities
                pl.BlockSpec((tile_n, 1), lambda i, k: (i, 0)),        # int targets
            ],
            out_specs=pl.BlockSpec((1, 8, 128), lambda i, k: (i, 0, 0)),
            scratch_shapes=[
                pltpu.VMEM((tile_n, 1), jnp.float32),   # running row max
                pltpu.VMEM((tile_n, 1), jnp.float32),   # running sum of exp
                pltpu.VMEM((tile_n, 1), jnp.float32),   # captured target logit
            ],
        ),
        compiler_params=pltpu.CompilerParams(
            dimension_semantics=("parallel", "arbitrary"),
            vmem_limit_bytes=vmem_limit,
        ),
    )(inputs, t2)

    return jnp.sum(partial_sums[:, 0, 0]) / n


def _reference_loss(x, t, scale=1.0):
    """Pure-JAX transcription of PyTorch nca() (margin=0, exclude_pos_denominator)."""
    s = scale * x.astype(jnp.float32)
    s = s - jnp.max(s, axis=1, keepdims=True)
    onehot = jax.nn.one_hot(t, x.shape[1], dtype=jnp.float32)
    numerator = jnp.sum(s * onehot, axis=1)
    denom = jnp.where(onehot > 0, 0.0, s)
    losses = -(numerator - jnp.log(jnp.sum(jnp.exp(denom), axis=1)))
    return jnp.mean(losses)


if __name__ == "__main__":
    key = jax.random.PRNGKey(0)
    k1, k2, k3, k4 = jax.random.split(key, 4)

    # Case 1: small shapes, auto tiling (single row tile, single class tile).
    N1, C1 = 64, 32
    x1 = jax.random.normal(k1, (N1, C1), dtype=jnp.float32)
    t1 = jax.random.randint(k2, (N1,), 0, C1, dtype=jnp.int32)
    out1 = jax.block_until_ready(unbiased_nca_loss(x1, t1, scale=1.0, margin=0.0))
    ref1 = _reference_loss(x1, t1, scale=1.0)
    assert jnp.allclose(out1, ref1, atol=2e-5, rtol=2e-5), (out1, ref1)

    # Case 2: ragged N, multiple row tiles, multiple class tiles, scale != 1
    # (forces the masked tail-row and masked tail-class paths plus the online LSE).
    N2, C2 = 100, 200
    x2 = jax.random.normal(k3, (N2, C2), dtype=jnp.float32)
    t2 = jax.random.randint(k4, (N2,), 0, C2, dtype=jnp.int32)
    out2 = jax.block_until_ready(
        unbiased_nca_loss(x2, t2, scale=2.0, margin=0.0, tile_n=16, tile_c=128))
    ref2 = _reference_loss(x2, t2, scale=2.0)
    assert jnp.allclose(out2, ref2, atol=2e-5, rtol=2e-5), (out2, ref2)

    # Case 3: bf16 similarities (kernel upcasts to f32 internally).
    x1_bf16 = x1.astype(jnp.bfloat16)
    out3 = jax.block_until_ready(unbiased_nca_loss(x1_bf16, t1, scale=1.0, margin=0.0))
    ref3 = _reference_loss(x1_bf16, t1, scale=1.0)
    assert jnp.allclose(out3, ref3, atol=1e-4, rtol=1e-4), (out3, ref3)

    print("KERNEL_OK")
</pallas_src>

<mosaic_0001>
module attributes {stable_mosaic.version = 11 : i64} {
  func.func @_nca_kernel(%arg0: i32, %arg1: i32, %arg2: memref<64x32xf32, #tpu.memory_space<vmem>>, %arg3: memref<64x1xi32, #tpu.memory_space<vmem>>, %arg4: memref<1x8x128xf32, #tpu.memory_space<vmem>>, %arg5: memref<64x1xf32, #tpu.memory_space<vmem>>, %arg6: memref<64x1xf32, #tpu.memory_space<vmem>>, %arg7: memref<64x1xf32, #tpu.memory_space<vmem>>) attributes {dimension_semantics = [#tpu.dimension_semantics<parallel>, #tpu.dimension_semantics<arbitrary>], iteration_bounds = array<i64: 1, 1>, scalar_prefetch = 0 : i64, scratch_operands = 3 : i64, tpu.core_type = #tpu.core_type<tc>, window_params = [{transform_indices = @transform_0, window_bounds = array<i64: 64, 32>}, {transform_indices = @transform_1, window_bounds = array<i64: 64, 1>}, {transform_indices = @transform_2, window_bounds = array<i64: 1, 8, 128>}]} {
    %c0_i32 = arith.constant 0 : i32
    %0 = arith.cmpi eq, %arg1, %c0_i32 : i32
    %1 = arith.extui %0 : i1 to i32
    %c0_i32_0 = arith.constant 0 : i32
    %2 = arith.cmpi ne, %1, %c0_i32_0 : i32
    scf.if %2 {
      %cst_21 = arith.constant 0xFF800000 : f32
      %37 = vector.broadcast %cst_21 : f32 to vector<64x1xf32>
      %c0_22 = arith.constant 0 : index
      %c0_23 = arith.constant 0 : index
      %38 = vector.load %arg5[%c0_22, %c0_23] : memref<64x1xf32, #tpu.memory_space<vmem>>, vector<64x1xf32>
      tpu.vector_store %arg5[%c0_22, %c0_23], %37 {strides = array<i32>} : memref<64x1xf32, #tpu.memory_space<vmem>>, vector<64x1xf32>,
      %cst_24 = arith.constant 0.000000e+00 : f32
      %39 = vector.broadcast %cst_24 : f32 to vector<64x1xf32>
      %c0_25 = arith.constant 0 : index
      %c0_26 = arith.constant 0 : index
      %40 = vector.load %arg6[%c0_25, %c0_26] : memref<64x1xf32, #tpu.memory_space<vmem>>, vector<64x1xf32>
      tpu.vector_store %arg6[%c0_25, %c0_26], %39 {strides = array<i32>} : memref<64x1xf32, #tpu.memory_space<vmem>>, vector<64x1xf32>,
      %cst_27 = arith.constant 0.000000e+00 : f32
      %41 = vector.broadcast %cst_27 : f32 to vector<64x1xf32>
      %c0_28 = arith.constant 0 : index
      %c0_29 = arith.constant 0 : index
      %42 = vector.load %arg7[%c0_28, %c0_29] : memref<64x1xf32, #tpu.memory_space<vmem>>, vector<64x1xf32>
      tpu.vector_store %arg7[%c0_28, %c0_29], %41 {strides = array<i32>} : memref<64x1xf32, #tpu.memory_space<vmem>>, vector<64x1xf32>,
    } else {
    }
    %c0 = arith.constant 0 : index
    %c0_1 = arith.constant 0 : index
    %3 = vector.load %arg2[%c0, %c0_1] : memref<64x32xf32, #tpu.memory_space<vmem>>, vector<64x32xf32>
    %c32_i32 = arith.constant 32 : i32
    %4 = arith.muli %arg1, %c32_i32 : i32
    %5 = tpu.iota {dimensions = array<i32: 1>} : vector<64x32xi32>
    %6 = vector.broadcast %4 : i32 to vector<64x32xi32>
    %7 = arith.addi %6, %5 : vector<64x32xi32>
    %c0_2 = arith.constant 0 : index
    %c0_3 = arith.constant 0 : index
    %8 = vector.load %arg3[%c0_2, %c0_3] : memref<64x1xi32, #tpu.memory_space<vmem>>, vector<64x1xi32>
    %9 = vector.broadcast %8 : vector<64x1xi32> to vector<64x32xi32>
    %10 = arith.cmpi eq, %7, %9 : vector<64x32xi32>
    %c0_4 = arith.constant 0 : index
    %c0_5 = arith.constant 0 : index
    %11 = vector.load %arg7[%c0_4, %c0_5] : memref<64x1xf32, #tpu.memory_space<vmem>>, vector<64x1xf32>
    %cst = arith.constant 0.000000e+00 : f32
    %12 = vector.broadcast %cst : f32 to vector<64x32xf32>
    %13 = arith.select %10, %3, %12 : vector<64x32xi1>, vector<64x32xf32>
    %cst_6 = arith.constant dense<0.000000e+00> : vector<64xf32>
    %14 = vector.multi_reduction <add>, %13, %cst_6 [1] : vector<64x32xf32> to vector<64xf32>
    %15 = vector.shape_cast %14 : vector<64xf32> to vector<64x1xf32>
    %16 = arith.addf %11, %15 : vector<64x1xf32>
    %c0_7 = arith.constant 0 : index
    %c0_8 = arith.constant 0 : index
    %17 = vector.load %arg7[%c0_7, %c0_8] : memref<64x1xf32, #tpu.memory_space<vmem>>, vector<64x1xf32>
    tpu.vector_store %arg7[%c0_7, %c0_8], %16 {strides = array<i32>} : memref<64x1xf32, #tpu.memory_space<vmem>>, vector<64x1xf32>,
    %c0_9 = arith.constant 0 : index
    %c0_10 = arith.constant 0 : index
    %18 = vector.load %arg5[%c0_9, %c0_10] : memref<64x1xf32, #tpu.memory_space<vmem>>, vector<64x1xf32>
    %cst_11 = arith.constant dense<0xFF800000> : vector<64xf32>
    %19 = vector.multi_reduction <maximumf>, %3, %cst_11 [1] : vector<64x32xf32> to vector<64xf32>
    %20 = vector.shape_cast %19 : vector<64xf32> to vector<64x1xf32>
    %21 = arith.maximumf %18, %20 : vector<64x1xf32>
    %c0_12 = arith.constant 0 : index
    %c0_13 = arith.constant 0 : index
    %22 = vector.load %arg6[%c0_12, %c0_13] : memref<64x1xf32, #tpu.memory_space<vmem>>, vector<64x1xf32>
    %23 = arith.subf %18, %21 : vector<64x1xf32>
    %24 = math.exp %23 : vector<64x1xf32>
    %25 = arith.mulf %22, %24 : vector<64x1xf32>
    %26 = vector.broadcast %21 : vector<64x1xf32> to vector<64x32xf32>
    %27 = arith.subf %3, %26 : vector<64x32xf32>
    %28 = math.exp %27 : vector<64x32xf32>
    %cst_14 = arith.constant dense<0.000000e+00> : vector<64xf32>
    %29 = vector.multi_reduction <add>, %28, %cst_14 [1] : vector<64x32xf32> to vector<64xf32>
    %30 = vector.shape_cast %29 : vector<64xf32> to vector<64x1xf32>
    %31 = arith.addf %25, %30 : vector<64x1xf32>
    %c0_15 = arith.constant 0 : index
    %c0_16 = arith.constant 0 : index
    %32 = vector.load %arg6[%c0_15, %c0_16] : memref<64x1xf32, #tpu.memory_space<vmem>>, vector<64x1xf32>
    tpu.vector_store %arg6[%c0_15, %c0_16], %31 {strides = array<i32>} : memref<64x1xf32, #tpu.memory_space<vmem>>, vector<64x1xf32>,
    %c0_17 = arith.constant 0 : index
    %c0_18 = arith.constant 0 : index
    %33 = vector.load %arg5[%c0_17, %c0_18] : memref<64x1xf32, #tpu.memory_space<vmem>>, vector<64x1xf32>
    tpu.vector_store %arg5[%c0_17, %c0_18], %21 {strides = array<i32>} : memref<64x1xf32, #tpu.memory_space<vmem>>, vector<64x1xf32>,
    %c0_i32_19 = arith.constant 0 : i32
    %34 = arith.cmpi eq, %arg1, %c0_i32_19 : i32
    %35 = arith.extui %34 : i1 to i32
    %c0_i32_20 = arith.constant 0 : i32
    %36 = arith.cmpi ne, %35, %c0_i32_20 : i32
    scf.if %36 {
      %c0_21 = arith.constant 0 : index
      %c0_22 = arith.constant 0 : index
      %37 = vector.load %arg7[%c0_21, %c0_22] : memref<64x1xf32, #tpu.memory_space<vmem>>, vector<64x1xf32>
      %c0_23 = arith.constant 0 : index
      %c0_24 = arith.constant 0 : index
      %38 = vector.load %arg5[%c0_23, %c0_24] : memref<64x1xf32, #tpu.memory_space<vmem>>, vector<64x1xf32>
      %39 = arith.subf %37, %38 : vector<64x1xf32>
      %c0_25 = arith.constant 0 : index
      %c0_26 = arith.constant 0 : index
      %40 = vector.load %arg6[%c0_25, %c0_26] : memref<64x1xf32, #tpu.memory_space<vmem>>, vector<64x1xf32>
      %41 = math.exp %39 : vector<64x1xf32>
      %42 = arith.subf %40, %41 : vector<64x1xf32>
      %cst_27 = arith.constant 1.000000e+00 : f32
      %43 = vector.broadcast %cst_27 : f32 to vector<64x1xf32>
      %44 = arith.addf %42, %43 : vector<64x1xf32>
      %45 = math.log %44 : vector<64x1xf32>
      %46 = arith.subf %45, %39 : vector<64x1xf32>
      %c64_i32 = arith.constant 64 : i32
      %47 = arith.muli %arg0, %c64_i32 : i32
      %48 = tpu.iota {dimensions = array<i32: 0>} : vector<64x1xi32>
      %49 = vector.broadcast %47 : i32 to vector<64x1xi32>
      %50 = arith.addi %49, %48 : vector<64x1xi32>
      %c64_i32_28 = arith.constant 64 : i32
      %51 = vector.broadcast %c64_i32_28 : i32 to vector<64x1xi32>
      %52 = arith.cmpi slt, %50, %51 : vector<64x1xi32>
      %cst_29 = arith.constant 0.000000e+00 : f32
      %53 = vector.broadcast %cst_29 : f32 to vector<64x1xf32>
      %54 = arith.select %52, %46, %53 : vector<64x1xi1>, vector<64x1xf32>
      %cst_30 = arith.constant dense<0.000000e+00> : vector<1xf32>
      %55 = vector.multi_reduction <add>, %54, %cst_30 [0] : vector<64x1xf32> to vector<1xf32>
      %56 = vector.shape_cast %55 : vector<1xf32> to vector<1x1xf32>
      %57 = vector.shape_cast %56 : vector<1x1xf32> to vector<1x1xf32>
      %58 = vector.broadcast %57 : vector<1x1xf32> to vector<8x128xf32>
      %c0_31 = arith.constant 0 : index
      %c0_32 = arith.constant 0 : index
      %c0_33 = arith.constant 0 : index
      %59 = vector.load %arg4[%c0_31, %c0_32, %c0_33] : memref<1x8x128xf32, #tpu.memory_space<vmem>>, vector<1x8x128xf32>
      %60 = vector.shape_cast %59 : vector<1x8x128xf32> to vector<8x128xf32>
      %61 = vector.shape_cast %58 : vector<8x128xf32> to vector<1x8x128xf32>
      tpu.vector_store %arg4[%c0_31, %c0_32, %c0_33], %61 {strides = array<i32>} : memref<1x8x128xf32, #tpu.memory_space<vmem>>, vector<1x8x128xf32>,
    } else {
    }
    return
  }
  func.func @transform_0(%arg0: i32, %arg1: i32) -> (i32, i32) {
    %c0_i32 = arith.constant 0 : i32
    return %arg0, %arg1 : i32, i32
  }
  func.func @transform_1(%arg0: i32, %arg1: i32) -> (i32, i32) {
    %c0_i32 = arith.constant 0 : i32
    %c0_i32_0 = arith.constant 0 : i32
    return %arg0, %c0_i32 : i32, i32
  }
  func.func @transform_2(%arg0: i32, %arg1: i32) -> (i32, i32, i32) {
    %c0_i32 = arith.constant 0 : i32
    %c0_i32_0 = arith.constant 0 : i32
    %c0_i32_1 = arith.constant 0 : i32
    return %arg0, %c0_i32, %c0_i32_0 : i32, i32, i32
  }
}

</mosaic_0001>

<llo_original>
// kernel: tpu_custom_call.1
$region0: #{tpu_custom_call.1}
  #allocation0 [shape = 'u32[]', space=smem, size = 0x4, offset = 0x4, fixed_abs, tag = 'smem constant byte address 0x4 - core index']
  #allocation1 [shape = 'u32[72,128]{1,0:T(1,128)}', space=vmem, size = 0x9000, scoped, tag = 'internal scratch']
  #allocation2 [shape = 'f32[64,1]{1,0:T(8,128)}', space=vmem, size = 0x8000, scoped, tag = 'scratch operand']
  #allocation3 [shape = 'f32[64,1]{1,0:T(8,128)}', space=vmem, size = 0x8000, scoped, tag = 'scratch operand']
  #allocation4 [shape = 'f32[64,1]{1,0:T(8,128)}', space=vmem, size = 0x8000, scoped, tag = 'scratch operand']
  %s0 = inlined_call_operand.vmem [shape: f32[64,32], index: 0, kind: input, shape index: {}]
  %s1 = inlined_call_operand.vmem [shape: s32[64,1], index: 1, kind: input, shape index: {}]
  %s2 = inlined_call_operand.hbm [shape: f32[1,8,128], index: 2, kind: output, shape index: {}]
  %s3 = sld [smem:[#allocation0]]
  $region26: #{tpu_custom_call.1} parent=0
    _
  %s5 = ssub.s32 1, %s3
  %s6 = scalar_select 0, %s5, %s3
  $region1: #{tpu_custom_call.1} parent=0
    #allocation5 [shape = 'u8[4096]{0}', space=vmem, size = 0x1000, scoped, tag = 'output window, operand 0, single buffered']
    #allocation6 [shape = 's32[1]{0}', space=sflag, size = 0x4, scoped, tag = 'scoped memory for tpu_custom_call.1']
    %7 = vsyncpa [#allocation6], 0
    // Predicated region
    $region2: #{tpu_custom_call.1} parent=1 // pred_check
      _
    $region3: #{tpu_custom_call.1} parent=1 // pred_check_branch
      %9 = sbr.rel (0) target = $region5
    $region4: #{tpu_custom_call.1} parent=1 // pred_region
      _
    $region5: #{tpu_custom_call.1} parent=1 // pred_fallthru
      _
    // Predicated region
    $region6: #{tpu_custom_call.1} parent=1 // pred_check
      _
    $region7: #{tpu_custom_call.1} parent=1 // pred_check_branch
      %11 = sbr.rel (0) target = $region9
    $region8: #{tpu_custom_call.1} parent=1 // pred_region
      _
    $region9: #{tpu_custom_call.1} parent=1 // pred_fallthru
      _
    %p12 = scmp.eq.s32.totalorder 0, 0
    // Predicated region
    $region10: #{tpu_custom_call.1} parent=1 // pred_check
      %p13 = pneg %p12
    $region11: #{tpu_custom_call.1} parent=1 // pred_check_branch
      %15 = sbr.rel (%p13) target = $region13
    $region12: #{tpu_custom_call.1} parent=1 // pred_region
      %vm16 = vcmask 7168
      %17 = vst.msk [vmem:[#allocation2] sm:$0xff] %vm16, -inf
      %18 = vst.msk [vmem:[#allocation2 + $0x8] sm:$0xff] %vm16, -inf
      %19 = vst.msk [vmem:[#allocation2 + $0x10] sm:$0xff] %vm16, -inf
      %20 = vst.msk [vmem:[#allocation2 + $0x18] sm:$0xff] %vm16, -inf
      %21 = vst.msk [vmem:[#allocation2 + $0x20] sm:$0xff] %vm16, -inf
      %22 = vst.msk [vmem:[#allocation2 + $0x28] sm:$0xff] %vm16, -inf
      %23 = vst.msk [vmem:[#allocation2 + $0x30] sm:$0xff] %vm16, -inf
      %24 = vst.msk [vmem:[#allocation2 + $0x38] sm:$0xff] %vm16, -inf
      %25 = vst.msk [vmem:[#allocation3] sm:$0xff] %vm16, 0.0
      %26 = vst.msk [vmem:[#allocation3 + $0x8] sm:$0xff] %vm16, 0.0
      %27 = vst.msk [vmem:[#allocation3 + $0x10] sm:$0xff] %vm16, 0.0
      %28 = vst.msk [vmem:[#allocation3 + $0x18] sm:$0xff] %vm16, 0.0
      %29 = vst.msk [vmem:[#allocation3 + $0x20] sm:$0xff] %vm16, 0.0
      %30 = vst.msk [vmem:[#allocation3 + $0x28] sm:$0xff] %vm16, 0.0
      %31 = vst.msk [vmem:[#allocation3 + $0x30] sm:$0xff] %vm16, 0.0
      %32 = vst.msk [vmem:[#allocation3 + $0x38] sm:$0xff] %vm16, 0.0
      %33 = vst.msk [vmem:[#allocation4] sm:$0xff] %vm16, 0.0
      %34 = vst.msk [vmem:[#allocation4 + $0x8] sm:$0xff] %vm16, 0.0
      %35 = vst.msk [vmem:[#allocation4 + $0x10] sm:$0xff] %vm16, 0.0
      %36 = vst.msk [vmem:[#allocation4 + $0x18] sm:$0xff] %vm16, 0.0
      %37 = vst.msk [vmem:[#allocation4 + $0x20] sm:$0xff] %vm16, 0.0
      %38 = vst.msk [vmem:[#allocation4 + $0x28] sm:$0xff] %vm16, 0.0
      %39 = vst.msk [vmem:[#allocation4 + $0x30] sm:$0xff] %vm16, 0.0
      %40 = vst.msk [vmem:[#allocation4 + $0x38] sm:$0xff] %vm16, 0.0
    $region13: #{tpu_custom_call.1} parent=1 // pred_fallthru
      _
    %v41 = vld [vmem:[%s0] sm:$0xff]
    %v42 = vld [vmem:[%s0 + $0x8] sm:$0xff]
    %v43 = vld [vmem:[%s0 + $0x10] sm:$0xff]
    %v44 = vld [vmem:[%s0 + $0x18] sm:$0xff]
    %v45 = vld [vmem:[%s0 + $0x20] sm:$0xff]
    %v46 = vld [vmem:[%s0 + $0x28] sm:$0xff]
    %v47 = vld [vmem:[%s0 + $0x30] sm:$0xff]
    %v48 = vld [vmem:[%s0 + $0x38] sm:$0xff]
    %s49 = smul.u32 0, 32
    %v50 = vlaneseq
    %v51 = vand.u32 %v50, 127
    %v52 = vstv %s49
    %v53 = vadd.s32 %v52, %v51
    %v54 = vld [vmem:[%s1] sm:$0xff]
    %v55 = vld [vmem:[%s1 + $0x8] sm:$0xff]
    %v56 = vld [vmem:[%s1 + $0x10] sm:$0xff]
    %v57 = vld [vmem:[%s1 + $0x18] sm:$0xff]
    %v58 = vld [vmem:[%s1 + $0x20] sm:$0xff]
    %v59 = vld [vmem:[%s1 + $0x28] sm:$0xff]
    %v60 = vld [vmem:[%s1 + $0x30] sm:$0xff]
    %v61 = vld [vmem:[%s1 + $0x38] sm:$0xff]
    %62 = vset.pattern.permute.xlu0 0
    %63 = vperm.xlu0 %62, %v54
    %v64 = vpop.permute.xlu0 %63
    %65 = vset.pattern.permute.xlu0 0
    %66 = vperm.xlu0 %65, %v55
    %v67 = vpop.permute.xlu0 %66
    %68 = vset.pattern.permute.xlu0 0
    %69 = vperm.xlu0 %68, %v56
    %v70 = vpop.permute.xlu0 %69
    %71 = vset.pattern.permute.xlu0 0
    %72 = vperm.xlu0 %71, %v57
    %v73 = vpop.permute.xlu0 %72
    %74 = vset.pattern.permute.xlu0 0
    %75 = vperm.xlu0 %74, %v58
    %v76 = vpop.permute.xlu0 %75
    %77 = vset.pattern.permute.xlu0 0
    %78 = vperm.xlu0 %77, %v59
    %v79 = vpop.permute.xlu0 %78
    %80 = vset.pattern.permute.xlu0 0
    %81 = vperm.xlu0 %80, %v60
    %v82 = vpop.permute.xlu0 %81
    %83 = vset.pattern.permute.xlu0 0
    %84 = vperm.xlu0 %83, %v61
    %v85 = vpop.permute.xlu0 %84
    %vm86 = vcmp.eq.s32.totalorder %v53, %v64
    %vm87 = vcmp.eq.s32.totalorder %v53, %v67
    %vm88 = vcmp.eq.s32.totalorder %v53, %v70
    %vm89 = vcmp.eq.s32.totalorder %v53, %v73
    %vm90 = vcmp.eq.s32.totalorder %v53, %v76
    %vm91 = vcmp.eq.s32.totalorder %v53, %v79
    %vm92 = vcmp.eq.s32.totalorder %v53, %v82
    %vm93 = vcmp.eq.s32.totalorder %v53, %v85
    %v94 = vld [vmem:[#allocation4] sm:$0xff]
    %v95 = vld [vmem:[#allocation4 + $0x8] sm:$0xff]
    %v96 = vld [vmem:[#allocation4 + $0x10] sm:$0xff]
    %v97 = vld [vmem:[#allocation4 + $0x18] sm:$0xff]
    %v98 = vld [vmem:[#allocation4 + $0x20] sm:$0xff]
    %v99 = vld [vmem:[#allocation4 + $0x28] sm:$0xff]
    %v100 = vld [vmem:[#allocation4 + $0x30] sm:$0xff]
    %v101 = vld [vmem:[#allocation4 + $0x38] sm:$0xff]
    %v102 = vsel %vm86, %v41, 0.0
    %v103 = vsel %vm87, %v42, 0.0
    %v104 = vsel %vm88, %v43, 0.0
    %v105 = vsel %vm89, %v44, 0.0
    %v106 = vsel %vm90, %v45, 0.0
    %v107 = vsel %vm91, %v46, 0.0
    %v108 = vsel %vm92, %v47, 0.0
    %v109 = vsel %vm93, %v48, 0.0
    %vm110 = vcmask 261120
    %v111 = vsel %vm110, %v102, 0.0
    %112 = vadd.xlane.f32.xlu0 %v111
    %v113 = vpop.xlane.xlu0 %112
    %v114 = vsel %vm110, %v103, 0.0
    %115 = vadd.xlane.f32.xlu0 %v114
    %v116 = vpop.xlane.xlu0 %115
    %v117 = vsel %vm110, %v104, 0.0
    %118 = vadd.xlane.f32.xlu0 %v117
    %v119 = vpop.xlane.xlu0 %118
    %v120 = vsel %vm110, %v105, 0.0
    %121 = vadd.xlane.f32.xlu0 %v120
    %v122 = vpop.xlane.xlu0 %121
    %v123 = vsel %vm110, %v106, 0.0
    %124 = vadd.xlane.f32.xlu0 %v123
    %v125 = vpop.xlane.xlu0 %124
    %v126 = vsel %vm110, %v107, 0.0
    %127 = vadd.xlane.f32.xlu0 %v126
    %v128 = vpop.xlane.xlu0 %127
    %v129 = vsel %vm110, %v108, 0.0
    %130 = vadd.xlane.f32.xlu0 %v129
    %v131 = vpop.xlane.xlu0 %130
    %v132 = vsel %vm110, %v109, 0.0
    %133 = vadd.xlane.f32.xlu0 %v132
    %v134 = vpop.xlane.xlu0 %133
    %v135 = vadd.f32 %v94, %v113
    %v136 = vadd.f32 %v95, %v116
    %v137 = vadd.f32 %v96, %v119
    %v138 = vadd.f32 %v97, %v122
    %v139 = vadd.f32 %v98, %v125
    %v140 = vadd.f32 %v99, %v128
    %v141 = vadd.f32 %v100, %v131
    %v142 = vadd.f32 %v101, %v134
    %vm143 = vcmask 7168
    %144 = vst.msk [vmem:[#allocation4] sm:$0xff] %vm143, %v135
    %145 = vst.msk [vmem:[#allocation4 + $0x8] sm:$0xff] %vm143, %v136
    %146 = vst.msk [vmem:[#allocation4 + $0x10] sm:$0xff] %vm143, %v137
    %147 = vst.msk [vmem:[#allocation4 + $0x18] sm:$0xff] %vm143, %v138
    %148 = vst.msk [vmem:[#allocation4 + $0x20] sm:$0xff] %vm143, %v139
    %149 = vst.msk [vmem:[#allocation4 + $0x28] sm:$0xff] %vm143, %v140
    %150 = vst.msk [vmem:[#allocation4 + $0x30] sm:$0xff] %vm143, %v141
    %151 = vst.msk [vmem:[#allocation4 + $0x38] sm:$0xff] %vm143, %v142
    %v152 = vld [vmem:[#allocation2] sm:$0xff]
    %v153 = vld [vmem:[#allocation2 + $0x8] sm:$0xff]
    %v154 = vld [vmem:[#allocation2 + $0x10] sm:$0xff]
    %v155 = vld [vmem:[#allocation2 + $0x18] sm:$0xff]
    %v156 = vld [vmem:[#allocation2 + $0x20] sm:$0xff]
    %v157 = vld [vmem:[#allocation2 + $0x28] sm:$0xff]
    %v158 = vld [vmem:[#allocation2 + $0x30] sm:$0xff]
    %v159 = vld [vmem:[#allocation2 + $0x38] sm:$0xff]
    %v160 = vsel %vm110, %v41, -inf
    %161 = vmax.xlane.f32.xlu0 %v160
    %v162 = vpop.xlane.xlu0 %161
    %v163 = vsel %vm110, %v42, -inf
    %164 = vmax.xlane.f32.xlu0 %v163
    %v165 = vpop.xlane.xlu0 %164
    %v166 = vsel %vm110, %v43, -inf
    %167 = vmax.xlane.f32.xlu0 %v166
    %v168 = vpop.xlane.xlu0 %167
    %v169 = vsel %vm110, %v44, -inf
    %170 = vmax.xlane.f32.xlu0 %v169
    %v171 = vpop.xlane.xlu0 %170
    %v172 = vsel %vm110, %v45, -inf
    %173 = vmax.xlane.f32.xlu0 %v172
    %v174 = vpop.xlane.xlu0 %173
    %v175 = vsel %vm110, %v46, -inf
    %176 = vmax.xlane.f32.xlu0 %v175
    %v177 = vpop.xlane.xlu0 %176
    %v178 = vsel %vm110, %v47, -inf
    %179 = vmax.xlane.f32.xlu0 %v178
    %v180 = vpop.xlane.xlu0 %179
    %v181 = vsel %vm110, %v48, -inf
    %182 = vmax.xlane.f32.xlu0 %v181
    %v183 = vpop.xlane.xlu0 %182
    %v184 = vmax.f32 %v152, %v162
    %v185 = vmax.f32 %v153, %v165
    %v186 = vmax.f32 %v154, %v168
    %v187 = vmax.f32 %v155, %v171
    %v188 = vmax.f32 %v156, %v174
    %v189 = vmax.f32 %v157, %v177
    %v190 = vmax.f32 %v158, %v180
    %v191 = vmax.f32 %v159, %v183
    %v192 = vld [vmem:[#allocation3] sm:$0xff]
    %v193 = vld [vmem:[#allocation3 + $0x8] sm:$0xff]
    %v194 = vld [vmem:[#allocation3 + $0x10] sm:$0xff]
    %v195 = vld [vmem:[#allocation3 + $0x18] sm:$0xff]
    %v196 = vld [vmem:[#allocation3 + $0x20] sm:$0xff]
    %v197 = vld [vmem:[#allocation3 + $0x28] sm:$0xff]
    %v198 = vld [vmem:[#allocation3 + $0x30] sm:$0xff]
    %v199 = vld [vmem:[#allocation3 + $0x38] sm:$0xff]
    %v200 = vsub.f32 %v152, %v184
    %v201 = vsub.f32 %v153, %v185
    %v202 = vsub.f32 %v154, %v186
    %v203 = vsub.f32 %v155, %v187
    %v204 = vsub.f32 %v156, %v188
    %v205 = vsub.f32 %v157, %v189
    %v206 = vsub.f32 %v158, %v190
    %v207 = vsub.f32 %v159, %v191
    %v208 = vmul.f32 %v200, 1.442695
    %v209 = vpow.pop %v208
    %v210 = vmul.f32 %v201, 1.442695
    %v211 = vpow.pop %v210
    %v212 = vmul.f32 %v202, 1.442695
    %v213 = vpow.pop %v212
    %v214 = vmul.f32 %v203, 1.442695
    %v215 = vpow.pop %v214
    %v216 = vmul.f32 %v204, 1.442695
    %v217 = vpow.pop %v216
    %v218 = vmul.f32 %v205, 1.442695
    %v219 = vpow.pop %v218
    %v220 = vmul.f32 %v206, 1.442695
    %v221 = vpow.pop %v220
    %v222 = vmul.f32 %v207, 1.442695
    %v223 = vpow.pop %v222
    %v224 = vmul.f32 %v192, %v209
    %v225 = vmul.f32 %v193, %v211
    %v226 = vmul.f32 %v194, %v213
    %v227 = vmul.f32 %v195, %v215
    %v228 = vmul.f32 %v196, %v217
    %v229 = vmul.f32 %v197, %v219
    %v230 = vmul.f32 %v198, %v221
    %v231 = vmul.f32 %v199, %v223
    %233 = vset.pattern.permute.xlu0 0
    %234 = vperm.xlu0 %233, %v184
    %v235 = vpop.permute.xlu0 %234
    %238 = vset.pattern.permute.xlu0 0
    %239 = vperm.xlu0 %238, %v185
    %v240 = vpop.permute.xlu0 %239
    %243 = vset.pattern.permute.xlu0 0
    %244 = vperm.xlu0 %243, %v186
    %v245 = vpop.permute.xlu0 %244
    %248 = vset.pattern.permute.xlu0 0
    %249 = vperm.xlu0 %248, %v187
    %v250 = vpop.permute.xlu0 %249
    %253 = vset.pattern.permute.xlu0 0
    %254 = vperm.xlu0 %253, %v188
    %v255 = vpop.permute.xlu0 %254
    %258 = vset.pattern.permute.xlu0 0
    %259 = vperm.xlu0 %258, %v189
    %v260 = vpop.permute.xlu0 %259
    %263 = vset.pattern.permute.xlu0 0
    %264 = vperm.xlu0 %263, %v190
    %v265 = vpop.permute.xlu0 %264
    %268 = vset.pattern.permute.xlu0 0
    %269 = vperm.xlu0 %268, %v191
    %v270 = vpop.permute.xlu0 %269
    %v272 = vsub.f32 %v41, %v235
    %v273 = vsub.f32 %v42, %v240
    %v274 = vsub.f32 %v43, %v245
    %v275 = vsub.f32 %v44, %v250
    %v276 = vsub.f32 %v45, %v255
    %v277 = vsub.f32 %v46, %v260
    %v278 = vsub.f32 %v47, %v265
    %v279 = vsub.f32 %v48, %v270
    %v280 = vmul.f32 %v272, 1.442695
    %v281 = vpow.pop %v280
    %v282 = vmul.f32 %v273, 1.442695
    %v283 = vpow.pop %v282
    %v284 = vmul.f32 %v274, 1.442695
    %v285 = vpow.pop %v284
    %v286 = vmul.f32 %v275, 1.442695
    %v287 = vpow.pop %v286
    %v288 = vmul.f32 %v276, 1.442695
    %v289 = vpow.pop %v288
    %v290 = vmul.f32 %v277, 1.442695
    %v291 = vpow.pop %v290
    %v292 = vmul.f32 %v278, 1.442695
    %v293 = vpow.pop %v292
    %v294 = vmul.f32 %v279, 1.442695
    %v295 = vpow.pop %v294
    %v296 = vsel %vm110, %v281, 0.0
    %297 = vadd.xlane.f32.xlu0 %v296
    %v298 = vpop.xlane.xlu0 %297
    %v299 = vsel %vm110, %v283, 0.0
    %300 = vadd.xlane.f32.xlu0 %v299
    %v301 = vpop.xlane.xlu0 %300
    %v302 = vsel %vm110, %v285, 0.0
    %303 = vadd.xlane.f32.xlu0 %v302
    %v304 = vpop.xlane.xlu0 %303
    %v305 = vsel %vm110, %v287, 0.0
    %306 = vadd.xlane.f32.xlu0 %v305
    %v307 = vpop.xlane.xlu0 %306
    %v308 = vsel %vm110, %v289, 0.0
    %309 = vadd.xlane.f32.xlu0 %v308
    %v310 = vpop.xlane.xlu0 %309
    %v311 = vsel %vm110, %v291, 0.0
    %312 = vadd.xlane.f32.xlu0 %v311
    %v313 = vpop.xlane.xlu0 %312
    %v314 = vsel %vm110, %v293, 0.0
    %315 = vadd.xlane.f32.xlu0 %v314
    %v316 = vpop.xlane.xlu0 %315
    %v317 = vsel %vm110, %v295, 0.0
    %318 = vadd.xlane.f32.xlu0 %v317
    %v319 = vpop.xlane.xlu0 %318
    %v320 = vadd.f32 %v224, %v298
    %v321 = vadd.f32 %v225, %v301
    %v322 = vadd.f32 %v226, %v304
    %v323 = vadd.f32 %v227, %v307
    %v324 = vadd.f32 %v228, %v310
    %v325 = vadd.f32 %v229, %v313
    %v326 = vadd.f32 %v230, %v316
    %v327 = vadd.f32 %v231, %v319
    %328 = vst.msk [vmem:[#allocation3] sm:$0xff] %vm143, %v320
    %329 = vst.msk [vmem:[#allocation3 + $0x8] sm:$0xff] %vm143, %v321
    %330 = vst.msk [vmem:[#allocation3 + $0x10] sm:$0xff] %vm143, %v322
    %331 = vst.msk [vmem:[#allocation3 + $0x18] sm:$0xff] %vm143, %v323
    %332 = vst.msk [vmem:[#allocation3 + $0x20] sm:$0xff] %vm143, %v324
    %333 = vst.msk [vmem:[#allocation3 + $0x28] sm:$0xff] %vm143, %v325
    %334 = vst.msk [vmem:[#allocation3 + $0x30] sm:$0xff] %vm143, %v326
    %335 = vst.msk [vmem:[#allocation3 + $0x38] sm:$0xff] %vm143, %v327
    %336 = vst.msk [vmem:[#allocation2] sm:$0xff] %vm143, %v184
    %337 = vst.msk [vmem:[#allocation2 + $0x8] sm:$0xff] %vm143, %v185
    %338 = vst.msk [vmem:[#allocation2 + $0x10] sm:$0xff] %vm143, %v186
    %339 = vst.msk [vmem:[#allocation2 + $0x18] sm:$0xff] %vm143, %v187
    %340 = vst.msk [vmem:[#allocation2 + $0x20] sm:$0xff] %vm143, %v188
    %341 = vst.msk [vmem:[#allocation2 + $0x28] sm:$0xff] %vm143, %v189
    %342 = vst.msk [vmem:[#allocation2 + $0x30] sm:$0xff] %vm143, %v190
    %343 = vst.msk [vmem:[#allocation2 + $0x38] sm:$0xff] %vm143, %v191
    // Predicated region
    $region14: #{tpu_custom_call.1} parent=1 // pred_check
      %p344 = pneg %p12
    $region15: #{tpu_custom_call.1} parent=1 // pred_check_branch
      %346 = sbr.rel (%p344) target = $region17
    $region16: #{tpu_custom_call.1} parent=1 // pred_region
      %v347 = vld [vmem:[#allocation4] sm:$0xff]
      %v348 = vld [vmem:[#allocation4 + $0x8] sm:$0xff]
      %v349 = vld [vmem:[#allocation4 + $0x10] sm:$0xff]
      %v350 = vld [vmem:[#allocation4 + $0x18] sm:$0xff]
      %v351 = vld [vmem:[#allocation4 + $0x20] sm:$0xff]
      %v352 = vld [vmem:[#allocation4 + $0x28] sm:$0xff]
      %v353 = vld [vmem:[#allocation4 + $0x30] sm:$0xff]
      %v354 = vld [vmem:[#allocation4 + $0x38] sm:$0xff]
      %v355 = vld [vmem:[#allocation2] sm:$0xff]
      %v356 = vld [vmem:[#allocation2 + $0x8] sm:$0xff]
      %v357 = vld [vmem:[#allocation2 + $0x10] sm:$0xff]
      %v358 = vld [vmem:[#allocation2 + $0x18] sm:$0xff]
      %v359 = vld [vmem:[#allocation2 + $0x20] sm:$0xff]
      %v360 = vld [vmem:[#allocation2 + $0x28] sm:$0xff]
      %v361 = vld [vmem:[#allocation2 + $0x30] sm:$0xff]
      %v362 = vld [vmem:[#allocation2 + $0x38] sm:$0xff]
      %v363 = vsub.f32 %v347, %v355
      %v364 = vsub.f32 %v348, %v356
      %v365 = vsub.f32 %v349, %v357
      %v366 = vsub.f32 %v350, %v358
      %v367 = vsub.f32 %v351, %v359
      %v368 = vsub.f32 %v352, %v360
      %v369 = vsub.f32 %v353, %v361
      %v370 = vsub.f32 %v354, %v362
      %v371 = vld [vmem:[#allocation3] sm:$0xff]
      %v372 = vld [vmem:[#allocation3 + $0x8] sm:$0xff]
      %v373 = vld [vmem:[#allocation3 + $0x10] sm:$0xff]
      %v374 = vld [vmem:[#allocation3 + $0x18] sm:$0xff]
      %v375 = vld [vmem:[#allocation3 + $0x20] sm:$0xff]
      %v376 = vld [vmem:[#allocation3 + $0x28] sm:$0xff]
      %v377 = vld [vmem:[#allocation3 + $0x30] sm:$0xff]
      %v378 = vld [vmem:[#allocation3 + $0x38] sm:$0xff]
      %v379 = vmul.f32 %v363, 1.442695
      %v380 = vpow.pop %v379
      %v381 = vmul.f32 %v364, 1.442695
      %v382 = vpow.pop %v381
      %v383 = vmul.f32 %v365, 1.442695
      %v384 = vpow.pop %v383
      %v385 = vmul.f32 %v366, 1.442695
      %v386 = vpow.pop %v385
      %v387 = vmul.f32 %v367, 1.442695
      %v388 = vpow.pop %v387
      %v389 = vmul.f32 %v368, 1.442695
      %v390 = vpow.pop %v389
      %v391 = vmul.f32 %v369, 1.442695
      %v392 = vpow.pop %v391
      %v393 = vmul.f32 %v370, 1.442695
      %v394 = vpow.pop %v393
      %v395 = vsub.f32 %v371, %v380
      %v396 = vsub.f32 %v372, %v382
      %v397 = vsub.f32 %v373, %v384
      %v398 = vsub.f32 %v374, %v386
      %v399 = vsub.f32 %v375, %v388
      %v400 = vsub.f32 %v376, %v390
      %v401 = vsub.f32 %v377, %v392
      %v402 = vsub.f32 %v378, %v394
      %v403 = vadd.f32 %v395, 1.0
      %v404 = vadd.f32 %v396, 1.0
      %v405 = vadd.f32 %v397, 1.0
      %v406 = vadd.f32 %v398, 1.0
      %v407 = vadd.f32 %v399, 1.0
      %v408 = vadd.f32 %v400, 1.0
      %v409 = vadd.f32 %v401, 1.0
      %v410 = vadd.f32 %v402, 1.0
      %v411 = vlog2.pop %v403
      %v412 = vmul.f32 %v411, 0.6931472
      %v413 = vlog2.pop %v404
      %v414 = vmul.f32 %v413, 0.6931472
      %v415 = vlog2.pop %v405
      %v416 = vmul.f32 %v415, 0.6931472
      %v417 = vlog2.pop %v406
      %v418 = vmul.f32 %v417, 0.6931472
      %v419 = vlog2.pop %v407
      %v420 = vmul.f32 %v419, 0.6931472
      %v421 = vlog2.pop %v408
      %v422 = vmul.f32 %v421, 0.6931472
      %v423 = vlog2.pop %v409
      %v424 = vmul.f32 %v423, 0.6931472
      %v425 = vlog2.pop %v410
      %v426 = vmul.f32 %v425, 0.6931472
      %v427 = vsub.f32 %v412, %v363
      %v428 = vsub.f32 %v414, %v364
      %v429 = vsub.f32 %v416, %v365
      %v430 = vsub.f32 %v418, %v366
      %v431 = vsub.f32 %v420, %v367
      %v432 = vsub.f32 %v422, %v368
      %v433 = vsub.f32 %v424, %v369
      %v434 = vsub.f32 %v426, %v370
      %s435 = smul.u32 0, 64
      %v436 = vlaneseq
      %v437 = vshrl.u32 %v436, 7
      %v438 = vadd.s32 %v437, 8
      %v439 = vadd.s32 %v437, 16
      %v440 = vadd.s32 %v437, 24
      %v441 = vadd.s32 %v437, 32
      %v442 = vadd.s32 %v437, 40
      %v443 = vadd.s32 %v437, 48
      %v444 = vadd.s32 %v437, 56
      %v445 = vstv %s435
      %v446 = vadd.s32 %v445, %v437
      %v447 = vadd.s32 %v445, %v438
      %v448 = vadd.s32 %v445, %v439
      %v449 = vadd.s32 %v445, %v440
      %v450 = vadd.s32 %v445, %v441
      %v451 = vadd.s32 %v445, %v442
      %v452 = vadd.s32 %v445, %v443
      %v453 = vadd.s32 %v445, %v444
      %vm454 = vcmp.lt.s32.totalorder %v446, 64
      %vm455 = vcmp.lt.s32.totalorder %v447, 64
      %vm456 = vcmp.lt.s32.totalorder %v448, 64
      %vm457 = vcmp.lt.s32.totalorder %v449, 64
      %vm458 = vcmp.lt.s32.totalorder %v450, 64
      %vm459 = vcmp.lt.s32.totalorder %v451, 64
      %vm460 = vcmp.lt.s32.totalorder %v452, 64
      %vm461 = vcmp.lt.s32.totalorder %v453, 64
      %v462 = vsel %vm454, %v427, 0.0
      %v463 = vsel %vm455, %v428, 0.0
      %v464 = vsel %vm456, %v429, 0.0
      %v465 = vsel %vm457, %v430, 0.0
      %v466 = vsel %vm458, %v431, 0.0
      %v467 = vsel %vm459, %v432, 0.0
      %v468 = vsel %vm460, %v433, 0.0
      %v469 = vsel %vm461, %v434, 0.0
      %v470 = vsel %vm143, %v462, 0.0
      %v471 = vsel %vm143, %v463, 0.0
      %v472 = vadd.f32 %v470, %v471
      %v473 = vsel %vm143, %v464, 0.0
      %v474 = vadd.f32 %v472, %v473
      %v475 = vsel %vm143, %v465, 0.0
      %v476 = vadd.f32 %v474, %v475
      %v477 = vsel %vm143, %v466, 0.0
      %v478 = vadd.f32 %v476, %v477
      %v479 = vsel %vm143, %v467, 0.0
      %v480 = vadd.f32 %v478, %v479
      %v481 = vsel %vm143, %v468, 0.0
      %v482 = vadd.f32 %v480, %v481
      %v483 = vsel %vm143, %v469, 0.0
      %v484 = vadd.f32 %v482, %v483
      %v485 = vrot.slane %v484, 4
      %v486 = vadd.f32 %v484, %v485
      %v487 = vrot.slane %v486, 2
      %v488 = vadd.f32 %v486, %v487
      %v489 = vrot.slane %v488, 1
      %v490 = vadd.f32 %v488, %v489
      %492 = vset.pattern.permute.xlu0 0
      %493 = vperm.xlu0 %492, %v490
      %v494 = vpop.permute.xlu0 %493
      %496 = vst [vmem:[#allocation5] sm:$0xff] %v494
    $region17: #{tpu_custom_call.1} parent=1 // pred_fallthru
      _
    // Predicated region
    $region18: #{tpu_custom_call.1} parent=1 // pred_check
      _
    $region19: #{tpu_custom_call.1} parent=1 // pred_check_branch
      %498 = sbr.rel (0) target = $region21
    $region20: #{tpu_custom_call.1} parent=1 // pred_region
      %500 = vsyncadd [#allocation6], 0
      %s502 = sshll.u32 [#allocation5], 4
      %s503 = int_to_ptr.vmem [resolvable:$true] %s502
      %s504 = sshll.u32 %s2, 4
      %s505 = int_to_ptr.hbm [resolvable:$true] %s504
      %507 = dma.vmem_to_hbm [thread:$0]  %s503, 128, %s505, [#allocation6]
    $region21: #{tpu_custom_call.1} parent=1 // pred_fallthru
      _
    // Predicated region
    $region22: #{tpu_custom_call.1} parent=1 // pred_check
      _
    $region23: #{tpu_custom_call.1} parent=1 // pred_check_branch
      %509 = sbr.rel (0) target = $region25
    $region24: #{tpu_custom_call.1} parent=1 // pred_region
      %511 = dma.done [#allocation6], 128
    $region25: #{tpu_custom_call.1} parent=1 // pred_fallthru
      _
    %512 = vsyncpa [#allocation6], 1

</llo_original>
